<compile_context>
chip_gen: v6e
topology: v6e:2x2x1
jax: 0.10.0
libtpu: 0.0.40
codegen_flags: <defaults>
</compile_context>

<pallas_src>
import jax
import jax.numpy as jnp
from jax import lax
from jax.experimental import pallas as pl
from jax.experimental.pallas import tpu as pltpu

# ---------------- model hyper-parameters (small but faithful) ----------------
NB_CLASSES = 4
CHANS      = 8            # EEG electrodes (H in NCHW)
SAMPLES    = 64           # time samples   (W in NCHW)
KERN_LEN   = 8            # block1 temporal kernel length
F1         = 4            # temporal filters
D          = 2            # spatial filters per temporal filter
F2         = F1 * D       # pointwise filters (EEGNet default F2 = F1 * D)
KERN_LEN3  = 16           # block3 separable kernel, hard-coded (1, 16)

C2   = D * F1
T1   = SAMPLES // 4                  # time length after AvgPool2d((1, 4))
TF   = T1 // 8                       # time length after AvgPool2d((1, 8))
FEAT = F2 * TF                       # classifier input features


def _same_pad(k):
    # SamePadding() formula from the PyTorch module (per kernel dimension k).
    return k // 2 + (k - 2 * (k // 2)) - 1, k // 2


PAD1_L, PAD1_R = _same_pad(KERN_LEN)     # block1 temporal ZeroPad2d (left, right)
PAD3_L, PAD3_R = _same_pad(KERN_LEN3)    # block3 temporal ZeroPad2d (left, right)


def _round_up(x, m):
    return ((x + m - 1) // m) * m


KA      = CHANS * SAMPLES            # 512, flattened input features (no padding!)
CS      = C2 * SAMPLES               # 512, block1/2 activation width
FT      = F2 * T1                    # 128, block3 activation width
OUT_PAD = 128                        # lane-dense logits slab width (classes padded)
NB_MAX  = 1024                       # batch-tile cap (sweepable per generation)


# ------------------------------- Pallas kernel -------------------------------
def _eegnet_kernel(x_ref, wa_ref, ba_ref, wb_ref, bb_ref, wc_ref, bc_ref, out_ref):
    def elu(h):
        # f32 ELU; clamp the exponent input so exp never sees large positives.
        return jnp.where(h > 0, h, jnp.exp(jnp.minimum(h, 0.0)) - 1.0)

    # block1 + block2 (conv1+BN1 and depthwise spatial conv+BN2 folded into W_A)
    h = jnp.dot(x_ref[...], wa_ref[...], preferred_element_type=jnp.float32)
    h = elu(h + ba_ref[...])                                   # (NB, 512) f32

    # block3 linear part (AvgPool(1,4) + depthwise band + pointwise + bias + BN3)
    h = jnp.dot(h.astype(jnp.bfloat16), wb_ref[...],
                preferred_element_type=jnp.float32)
    h = elu(h + bb_ref[...])                                   # (NB, 128) f32

    # AvgPool(1,8) + Flatten + Linear, lane-dense (classes zero-padded to 128)
    out_ref[...] = (jnp.dot(h.astype(jnp.bfloat16), wc_ref[...],
                            preferred_element_type=jnp.float32)
                    + bc_ref[...]).astype(out_ref.dtype)


# ------------------------------ host-side glue --------------------------------
def _fold_bn(gamma, beta, mean, var):
    # nn.BatchNorm2d(C, False) -> eps=False==0.  Eval-mode fold to scale/shift.
    scale = gamma / jnp.sqrt(var)
    return scale, beta - mean * scale


def _conv_band(w_taps, out_len, in_len, pad_l):
    # band[..., t, u] = w_taps[..., u - t + pad_l], zero outside kernel support.
    k_len = w_taps.shape[-1]
    k = jnp.arange(in_len)[None, :] - jnp.arange(out_len)[:, None] + pad_l
    valid = (k >= 0) & (k < k_len)
    band = jnp.take(w_taps, jnp.clip(k, 0, k_len - 1), axis=-1)
    return jnp.where(valid, band, 0.0)


def _pool_mask(in_len, window):
    out_len = in_len // window
    m = (jnp.arange(in_len)[None, :] // window) == jnp.arange(out_len)[:, None]
    return m.astype(jnp.float32) / float(window)                 # (out, in)


def _fold_weights(params):
    """Fold the whole network into 3 dense matrices + 3 bias rows.

    Folding is done in f32 at HIGHEST precision; matmul operands (W_A/W_B/W_C)
    are cast to bf16 at the very end, biases stay f32.
    """
    (w1, bn1, w2, bn2, w3, w4, b4, bn3, wfc, bfc) = params
    hi = lax.Precision.HIGHEST

    s1, o1 = _fold_bn(*bn1)
    s2, o2 = _fold_bn(*bn2)
    s3, o3 = _fold_bn(*bn3)
    s2_fd, o2_fd = s2.reshape(F1, D), o2.reshape(F1, D)

    # --- W_A: SamePadding + conv1 (Toeplitz band over the UNPADDED time axis)
    #          + BN1 scale, depthwise spatial conv + BN2 scale.
    band1 = _conv_band(w1, SAMPLES, SAMPLES, PAD1_L)             # (F1, S, S)
    wa = jnp.einsum('fd,f,fdc,ftu->cufdt', s2_fd, s1, w2, band1, precision=hi)
    wa = wa.reshape(KA, CS)                                      # (512, 512)
    ba = s2_fd * o1[:, None] * w2.sum(-1) + o2_fd                # (F1, D)
    ba = jnp.broadcast_to(ba.reshape(C2, 1), (C2, SAMPLES)).reshape(1, CS)

    # --- W_B: AvgPool(1,4) -> separable depthwise band -> pointwise w4 -> BN3
    band3 = _conv_band(w3, T1, T1, PAD3_L)                       # (F1, D, T1, T1)
    pool4 = _pool_mask(SAMPLES, 4)                               # (T1, SAMPLES)
    wb = jnp.einsum('g,gfd,fdpq,qt->fdtgp', s3, w4, band3, pool4, precision=hi)
    wb = wb.reshape(CS, FT)
    bb = s3 * b4 + o3                                            # (F2,)
    bb = jnp.broadcast_to(bb.reshape(F2, 1), (F2, T1)).reshape(1, FT)

    # --- W_C: AvgPool(1,8) -> Flatten (channel-major) -> Linear, lane-padded
    pool8 = _pool_mask(T1, 8)                                    # (TF, T1)
    wc = jnp.einsum('kgq,qp->gpk', wfc.reshape(NB_CLASSES, F2, TF), pool8,
                    precision=hi).reshape(FT, NB_CLASSES)
    wc = jnp.pad(wc, ((0, 0), (0, OUT_PAD - NB_CLASSES)))
    bc = jnp.pad(bfc, (0, OUT_PAD - NB_CLASSES)).reshape(1, OUT_PAD)

    return (wa.astype(jnp.bfloat16), ba,
            wb.astype(jnp.bfloat16), bb,
            wc.astype(jnp.bfloat16), bc)


def _vmem_limit_bytes():
    # Derive the scoped-VMEM cap from the hardware (v5e/v6e: 128 MiB physical,
    # v7x: 64 MiB) with ~25% headroom; conservative 32 MiB fallback.
    try:
        phys = pltpu.get_tpu_info().vmem_capacity_bytes
        return max(32 * 1024 * 1024, min(int(phys * 3 // 4), 96 * 1024 * 1024))
    except Exception:
        return 32 * 1024 * 1024


def _pick_block_n(n):
    nb = min(NB_MAX, _round_up(n, 8))
    # If the whole (rounded) batch would be a single grid step, split it so the
    # 1-D "parallel" grid has >= 2 steps and both TensorCores on dual-core
    # parts (v7x) get work.  Below 16 rows a split isn't possible (8-row tiles).
    if n >= 16 and _round_up(n, nb) // nb < 2:
        nb = min(nb, _round_up((n + 1) // 2, 8))
    return nb


def eegnet_forward(x, params, block_n=None):
    # TODO(synk): training-mode BatchNorm (batch statistics) and Dropout masks
    # are not modeled; eval-mode semantics (running stats, dropout=identity).
    x = x.reshape(-1, KA).astype(jnp.bfloat16)    # x.view(-1,1,Chans,Samples), flattened
    n = x.shape[0]

    wa, ba, wb, bb, wc, bc = _fold_weights(params)

    nb = _pick_block_n(n) if block_n is None else block_n
    n_pad = _round_up(n, nb)
    xp = jnp.pad(x, ((0, n_pad - n), (0, 0)))     # batch padding only (KA = 512)

    const = lambda i: (0, 0)
    out_padded = pl.pallas_call(
        _eegnet_kernel,
        out_shape=jax.ShapeDtypeStruct((n_pad, OUT_PAD), jnp.bfloat16),
        grid=(n_pad // nb,),
        in_specs=[
            pl.BlockSpec((nb, KA), lambda i: (i, 0)),   # activations: batch-tiled
            pl.BlockSpec((KA, CS), const),              # W_A (bf16, VMEM-resident)
            pl.BlockSpec((1, CS), const),               # b_A (f32)
            pl.BlockSpec((CS, FT), const),              # W_B (bf16)
            pl.BlockSpec((1, FT), const),               # b_B (f32)
            pl.BlockSpec((FT, OUT_PAD), const),         # W_C (bf16, class-padded)
            pl.BlockSpec((1, OUT_PAD), const),          # b_C (f32)
        ],
        out_specs=pl.BlockSpec((nb, OUT_PAD), lambda i: (i, 0)),
        compiler_params=pltpu.CompilerParams(
            dimension_semantics=("parallel",),
            vmem_limit_bytes=_vmem_limit_bytes(),
        ),
    )(xp, wa, ba, wb, bb, wc, bc)

    return out_padded[:n, :NB_CLASSES].astype(jnp.float32)


# ----------------------- deterministic parameter init ------------------------
def init_params(key):
    ks = jax.random.split(key, 10)

    def rnd(k, shape, s=0.2):
        return (s * jax.random.normal(k, shape)).astype(jnp.float32)

    def bn(k, c):
        kg, kb, km, kv = jax.random.split(k, 4)
        gamma = 1.0 + rnd(kg, (c,), 0.1)
        beta = rnd(kb, (c,), 0.1)
        mean = rnd(km, (c,), 0.1)
        var = (1.0 + 0.2 * jnp.abs(jax.random.normal(kv, (c,)))).astype(jnp.float32)
        return gamma, beta, mean, var

    w1 = rnd(ks[0], (F1, KERN_LEN))              # Conv2d(1, F1, (1, kernLength))
    bn1 = bn(ks[1], F1)
    w2 = rnd(ks[2], (F1, D, CHANS))              # depthwise (Chans, 1), groups=F1
    bn2 = bn(ks[3], C2)
    w3 = rnd(ks[4], (F1, D, KERN_LEN3))          # separable depthwise (1, 16)
    w4 = rnd(ks[5], (F2, F1, D))                 # pointwise 1x1
    b4 = rnd(ks[6], (F2,), 0.1)
    bn3 = bn(ks[7], F2)
    wfc = rnd(ks[8], (NB_CLASSES, FEAT))         # Linear(FEAT, nb_classes)
    bfc = rnd(ks[9], (NB_CLASSES,), 0.1)
    return (w1, bn1, w2, bn2, w3, w4, b4, bn3, wfc, bfc)


# ------------------------ pure-JAX reference (validation) --------------------
def eegnet_reference(x, params):
    (w1, bn1, w2, bn2, w3, w4, b4, bn3, wfc, bfc) = params
    n = x.shape[0]
    dn = ("NCHW", "OIHW", "NCHW")
    hi = lax.Precision.HIGHEST
    s1, o1 = _fold_bn(*bn1)
    s2, o2 = _fold_bn(*bn2)
    s3, o3 = _fold_bn(*bn3)

    h = x.reshape(n, 1, CHANS, SAMPLES).astype(jnp.float32)
    h = lax.conv_general_dilated(h, w1.reshape(F1, 1, 1, KERN_LEN), (1, 1),
                                 ((0, 0), (PAD1_L, PAD1_R)), dimension_numbers=dn,
                                 precision=hi)
    h = h * s1[None, :, None, None] + o1[None, :, None, None]

    h = lax.conv_general_dilated(h, w2.reshape(C2, 1, CHANS, 1), (1, 1), "VALID",
                                 dimension_numbers=dn, feature_group_count=F1,
                                 precision=hi)
    h = h * s2[None, :, None, None] + o2[None, :, None, None]
    h = jax.nn.elu(h)
    h = h.reshape(n, C2, 1, T1, 4).mean(axis=-1)

    h = lax.conv_general_dilated(h, w3.reshape(F2, 1, 1, KERN_LEN3), (1, 1),
                                 ((0, 0), (PAD3_L, PAD3_R)), dimension_numbers=dn,
                                 feature_group_count=C2, precision=hi)
    h = lax.conv_general_dilated(h, w4.reshape(F2, F2, 1, 1), (1, 1), "VALID",
                                 dimension_numbers=dn, precision=hi)
    h = h + b4[None, :, None, None]
    h = h * s3[None, :, None, None] + o3[None, :, None, None]
    h = jax.nn.elu(h)
    h = h.reshape(n, F2, 1, TF, 8).mean(axis=-1)

    return jnp.dot(h.reshape(n, FEAT), wfc.T, precision=hi) + bfc


# ----------------------------------- main -------------------------------------
if __name__ == "__main__":
    key = jax.random.PRNGKey(0)
    kx, kp = jax.random.split(key)
    x = jax.random.normal(kx, (2, CHANS, SAMPLES), dtype=jnp.float32)
    params = init_params(kp)

    out = jax.jit(eegnet_forward)(x, params)
    out = jax.block_until_ready(out)

    ref = eegnet_reference(x, params)
    assert out.shape == (2, NB_CLASSES)
    err = float(jnp.max(jnp.abs(out - ref)))
    # bf16 matmul operands (f32 accumulation / f32 ELU & bias) -> allow ~bf16
    # rounding headroom while still catching any structural mistake.
    tol = 2e-2 * max(1.0, float(jnp.max(jnp.abs(ref))))
    assert err < tol, f"mismatch vs reference: max abs err = {err} (tol {tol})"
    print("KERNEL_OK")
</pallas_src>

<mosaic_0001>
module attributes {stable_mosaic.version = 11 : i64} {
  func.func @_eegnet_kernel(%arg0: i32, %arg1: memref<8x512xbf16, #tpu.memory_space<vmem>>, %arg2: memref<512x512xbf16, #tpu.memory_space<vmem>>, %arg3: memref<1x512xf32, #tpu.memory_space<vmem>>, %arg4: memref<512x128xbf16, #tpu.memory_space<vmem>>, %arg5: memref<1x128xf32, #tpu.memory_space<vmem>>, %arg6: memref<128x128xbf16, #tpu.memory_space<vmem>>, %arg7: memref<1x128xf32, #tpu.memory_space<vmem>>, %arg8: memref<8x128xbf16, #tpu.memory_space<vmem>>) attributes {dimension_semantics = [#tpu.dimension_semantics<parallel>], iteration_bounds = array<i64: 1>, scalar_prefetch = 0 : i64, scratch_operands = 0 : i64, tpu.core_type = #tpu.core_type<tc>, window_params = [{transform_indices = @transform_0, window_bounds = array<i64: 8, 512>}, {pipeline_mode = #tpu.pipeline_mode<synchronous>, transform_indices = @transform_1, window_bounds = array<i64: 512, 512>}, {pipeline_mode = #tpu.pipeline_mode<synchronous>, transform_indices = @transform_2, window_bounds = array<i64: 1, 512>}, {pipeline_mode = #tpu.pipeline_mode<synchronous>, transform_indices = @transform_3, window_bounds = array<i64: 512, 128>}, {pipeline_mode = #tpu.pipeline_mode<synchronous>, transform_indices = @transform_4, window_bounds = array<i64: 1, 128>}, {pipeline_mode = #tpu.pipeline_mode<synchronous>, transform_indices = @transform_5, window_bounds = array<i64: 128, 128>}, {pipeline_mode = #tpu.pipeline_mode<synchronous>, transform_indices = @transform_6, window_bounds = array<i64: 1, 128>}, {transform_indices = @transform_7, window_bounds = array<i64: 8, 128>}]} {
    %c0 = arith.constant 0 : index
    %c0_0 = arith.constant 0 : index
    %0 = vector.load %arg1[%c0, %c0_0] : memref<8x512xbf16, #tpu.memory_space<vmem>>, vector<8x512xbf16>
    %c0_1 = arith.constant 0 : index
    %c0_2 = arith.constant 0 : index
    %1 = vector.load %arg2[%c0_1, %c0_2] : memref<512x512xbf16, #tpu.memory_space<vmem>>, vector<512x512xbf16>
    %cst = arith.constant dense<0.000000e+00> : vector<8x512xf32>
    %2 = tpu.matmul %0, %1, %cst {dimension_numbers = #tpu.dot_dimension_numbers<[1], [0], [0], [1], [0, 0, 1, 1], [], []>} : vector<8x512xbf16>, vector<512x512xbf16>, vector<8x512xf32> -> vector<8x512xf32>
    %c0_3 = arith.constant 0 : index
    %c0_4 = arith.constant 0 : index
    %3 = vector.load %arg3[%c0_3, %c0_4] : memref<1x512xf32, #tpu.memory_space<vmem>>, vector<1x512xf32>
    %4 = vector.broadcast %3 : vector<1x512xf32> to vector<8x512xf32>
    %5 = arith.addf %2, %4 : vector<8x512xf32>
    %cst_5 = arith.constant 0.000000e+00 : f32
    %6 = vector.broadcast %cst_5 : f32 to vector<8x512xf32>
    %7 = arith.cmpf ogt, %5, %6 : vector<8x512xf32>
    %cst_6 = arith.constant 0.000000e+00 : f32
    %8 = vector.broadcast %cst_6 : f32 to vector<8x512xf32>
    %9 = arith.minimumf %5, %8 : vector<8x512xf32>
    %10 = math.exp %9 : vector<8x512xf32>
    %cst_7 = arith.constant 1.000000e+00 : f32
    %11 = vector.broadcast %cst_7 : f32 to vector<8x512xf32>
    %12 = arith.subf %10, %11 : vector<8x512xf32>
    %13 = arith.select %7, %5, %12 : vector<8x512xi1>, vector<8x512xf32>
    %14 = arith.truncf %13 : vector<8x512xf32> to vector<8x512xbf16>
    %c0_8 = arith.constant 0 : index
    %c0_9 = arith.constant 0 : index
    %15 = vector.load %arg4[%c0_8, %c0_9] : memref<512x128xbf16, #tpu.memory_space<vmem>>, vector<512x128xbf16>
    %cst_10 = arith.constant dense<0.000000e+00> : vector<8x128xf32>
    %16 = tpu.matmul %14, %15, %cst_10 {dimension_numbers = #tpu.dot_dimension_numbers<[1], [0], [0], [1], [0, 0, 1, 1], [], []>} : vector<8x512xbf16>, vector<512x128xbf16>, vector<8x128xf32> -> vector<8x128xf32>
    %c0_11 = arith.constant 0 : index
    %c0_12 = arith.constant 0 : index
    %17 = vector.load %arg5[%c0_11, %c0_12] : memref<1x128xf32, #tpu.memory_space<vmem>>, vector<1x128xf32>
    %18 = vector.broadcast %17 : vector<1x128xf32> to vector<8x128xf32>
    %19 = arith.addf %16, %18 : vector<8x128xf32>
    %cst_13 = arith.constant 0.000000e+00 : f32
    %20 = vector.broadcast %cst_13 : f32 to vector<8x128xf32>
    %21 = arith.cmpf ogt, %19, %20 : vector<8x128xf32>
    %cst_14 = arith.constant 0.000000e+00 : f32
    %22 = vector.broadcast %cst_14 : f32 to vector<8x128xf32>
    %23 = arith.minimumf %19, %22 : vector<8x128xf32>
    %24 = math.exp %23 : vector<8x128xf32>
    %cst_15 = arith.constant 1.000000e+00 : f32
    %25 = vector.broadcast %cst_15 : f32 to vector<8x128xf32>
    %26 = arith.subf %24, %25 : vector<8x128xf32>
    %27 = arith.select %21, %19, %26 : vector<8x128xi1>, vector<8x128xf32>
    %28 = arith.truncf %27 : vector<8x128xf32> to vector<8x128xbf16>
    %c0_16 = arith.constant 0 : index
    %c0_17 = arith.constant 0 : index
    %29 = vector.load %arg6[%c0_16, %c0_17] : memref<128x128xbf16, #tpu.memory_space<vmem>>, vector<128x128xbf16>
    %cst_18 = arith.constant dense<0.000000e+00> : vector<8x128xf32>
    %30 = tpu.matmul %28, %29, %cst_18 {dimension_numbers = #tpu.dot_dimension_numbers<[1], [0], [0], [1], [0, 0, 1, 1], [], []>} : vector<8x128xbf16>, vector<128x128xbf16>, vector<8x128xf32> -> vector<8x128xf32>
    %c0_19 = arith.constant 0 : index
    %c0_20 = arith.constant 0 : index
    %31 = vector.load %arg7[%c0_19, %c0_20] : memref<1x128xf32, #tpu.memory_space<vmem>>, vector<1x128xf32>
    %32 = vector.broadcast %31 : vector<1x128xf32> to vector<8x128xf32>
    %33 = arith.addf %30, %32 : vector<8x128xf32>
    %34 = arith.truncf %33 : vector<8x128xf32> to vector<8x128xbf16>
    %c0_21 = arith.constant 0 : index
    %c0_22 = arith.constant 0 : index
    %35 = vector.load %arg8[%c0_21, %c0_22] : memref<8x128xbf16, #tpu.memory_space<vmem>>, vector<8x128xbf16>
    tpu.vector_store %arg8[%c0_21, %c0_22], %34 {strides = array<i32>} : memref<8x128xbf16, #tpu.memory_space<vmem>>, vector<8x128xbf16>,
    return
  }
  func.func @transform_0(%arg0: i32) -> (i32, i32) {
    %c0_i32 = arith.constant 0 : i32
    %c0_i32_0 = arith.constant 0 : i32
    return %arg0, %c0_i32 : i32, i32
  }
  func.func @transform_1(%arg0: i32) -> (i32, i32) {
    %c0_i32 = arith.constant 0 : i32
    %c0_i32_0 = arith.constant 0 : i32
    %c0_i32_1 = arith.constant 0 : i32
    return %c0_i32, %c0_i32_0 : i32, i32
  }
  func.func @transform_2(%arg0: i32) -> (i32, i32) {
    %c0_i32 = arith.constant 0 : i32
    %c0_i32_0 = arith.constant 0 : i32
    %c0_i32_1 = arith.constant 0 : i32
    return %c0_i32, %c0_i32_0 : i32, i32
  }
  func.func @transform_3(%arg0: i32) -> (i32, i32) {
    %c0_i32 = arith.constant 0 : i32
    %c0_i32_0 = arith.constant 0 : i32
    %c0_i32_1 = arith.constant 0 : i32
    return %c0_i32, %c0_i32_0 : i32, i32
  }
  func.func @transform_4(%arg0: i32) -> (i32, i32) {
    %c0_i32 = arith.constant 0 : i32
    %c0_i32_0 = arith.constant 0 : i32
    %c0_i32_1 = arith.constant 0 : i32
    return %c0_i32, %c0_i32_0 : i32, i32
  }
  func.func @transform_5(%arg0: i32) -> (i32, i32) {
    %c0_i32 = arith.constant 0 : i32
    %c0_i32_0 = arith.constant 0 : i32
    %c0_i32_1 = arith.constant 0 : i32
    return %c0_i32, %c0_i32_0 : i32, i32
  }
  func.func @transform_6(%arg0: i32) -> (i32, i32) {
    %c0_i32 = arith.constant 0 : i32
    %c0_i32_0 = arith.constant 0 : i32
    %c0_i32_1 = arith.constant 0 : i32
    return %c0_i32, %c0_i32_0 : i32, i32
  }
  func.func @transform_7(%arg0: i32) -> (i32, i32) {
    %c0_i32 = arith.constant 0 : i32
    %c0_i32_0 = arith.constant 0 : i32
    return %arg0, %c0_i32 : i32, i32
  }
}

</mosaic_0001>

<llo_original>
// kernel: eegnet_forward.1
$region0: #{eegnet_forward.1}
  #allocation0 [shape = 'u32[]', space=smem, size = 0x4, offset = 0x4, fixed_abs, tag = 'smem constant byte address 0x4 - core index']
  #allocation1 [shape = 'u32[144,128]{1,0:T(1,128)}', space=vmem, size = 0x12000, scoped, tag = 'internal scratch']
  %s0 = inlined_call_operand.vmem [shape: bf16[8,512], index: 0, kind: input, shape index: {}]
  %s1 = inlined_call_operand.vmem [shape: bf16[512,512], index: 1, kind: input, shape index: {}]
  %s2 = inlined_call_operand.vmem [shape: f32[1,512], index: 2, kind: input, shape index: {}]
  %s3 = inlined_call_operand.vmem [shape: bf16[512,128], index: 3, kind: input, shape index: {}]
  %s4 = inlined_call_operand.vmem [shape: f32[1,128], index: 4, kind: input, shape index: {}]
  %s5 = inlined_call_operand.vmem [shape: bf16[128,128], index: 5, kind: input, shape index: {}]
  %s6 = inlined_call_operand.vmem [shape: f32[1,128], index: 6, kind: input, shape index: {}]
  %s7 = inlined_call_operand.vmem [shape: bf16[8,128], index: 7, kind: output, shape index: {}]
  %s8 = sld [smem:[#allocation0]]
  $region38: #{eegnet_forward.1} parent=0
    _
  %s10 = ssub.s32 1, %s8
  %s11 = scalar_select 0, %s10, %s8
  // Predicated region
  $region2: #{eegnet_forward.1} parent=0 // pred_check
    _
  $region3: #{eegnet_forward.1} parent=0 // pred_check_branch
    %13 = sbr.rel (0) target = $region5
  $region4: #{eegnet_forward.1} parent=0 // pred_region
    _
  $region5: #{eegnet_forward.1} parent=0 // pred_fallthru
    _
  // Predicated region
  $region6: #{eegnet_forward.1} parent=0 // pred_check
    _
  $region7: #{eegnet_forward.1} parent=0 // pred_check_branch
    %15 = sbr.rel (0) target = $region9
  $region8: #{eegnet_forward.1} parent=0 // pred_region
    _
  $region9: #{eegnet_forward.1} parent=0 // pred_fallthru
    _
  // Predicated region
  $region10: #{eegnet_forward.1} parent=0 // pred_check
    _
  $region11: #{eegnet_forward.1} parent=0 // pred_check_branch
    %17 = sbr.rel (0) target = $region13
  $region12: #{eegnet_forward.1} parent=0 // pred_region
    _
  $region13: #{eegnet_forward.1} parent=0 // pred_fallthru
    _
  // Predicated region
  $region14: #{eegnet_forward.1} parent=0 // pred_check
    _
  $region15: #{eegnet_forward.1} parent=0 // pred_check_branch
    %19 = sbr.rel (0) target = $region17
  $region16: #{eegnet_forward.1} parent=0 // pred_region
    _
  $region17: #{eegnet_forward.1} parent=0 // pred_fallthru
    _
  // Predicated region
  $region18: #{eegnet_forward.1} parent=0 // pred_check
    _
  $region19: #{eegnet_forward.1} parent=0 // pred_check_branch
    %21 = sbr.rel (0) target = $region21
  $region20: #{eegnet_forward.1} parent=0 // pred_region
    _
  $region21: #{eegnet_forward.1} parent=0 // pred_fallthru
    _
  // Predicated region
  $region22: #{eegnet_forward.1} parent=0 // pred_check
    _
  $region23: #{eegnet_forward.1} parent=0 // pred_check_branch
    %23 = sbr.rel (0) target = $region25
  $region24: #{eegnet_forward.1} parent=0 // pred_region
    _
  $region25: #{eegnet_forward.1} parent=0 // pred_fallthru
    _
  // Predicated region
  $region26: #{eegnet_forward.1} parent=0 // pred_check
    _
  $region27: #{eegnet_forward.1} parent=0 // pred_check_branch
    %25 = sbr.rel (0) target = $region29
  $region28: #{eegnet_forward.1} parent=0 // pred_region
    _
  $region29: #{eegnet_forward.1} parent=0 // pred_fallthru
    _
  %v27 = vld [vmem:[%s0] sm:$0xff]
  %v28 = vld [vmem:[%s0 + $0x8] sm:$0xff]
  %v29 = vld [vmem:[%s1] sm:$0xff]
  %v30 = vld [vmem:[%s1 + $0x8] sm:$0xff]
  %v31 = vld [vmem:[%s1 + $0x10] sm:$0xff]
  %v32 = vld [vmem:[%s1 + $0x18] sm:$0xff]
  %v33 = vld [vmem:[%s1 + $0x20] sm:$0xff]
  %v34 = vld [vmem:[%s1 + $0x28] sm:$0xff]
  %v35 = vld [vmem:[%s1 + $0x30] sm:$0xff]
  %v36 = vld [vmem:[%s1 + $0x38] sm:$0xff]
  %v37 = vld [vmem:[%s1 + $0x40] sm:$0xff]
  %v38 = vld [vmem:[%s1 + $0x48] sm:$0xff]
  %v39 = vld [vmem:[%s1 + $0x50] sm:$0xff]
  %v40 = vld [vmem:[%s1 + $0x58] sm:$0xff]
  %v41 = vld [vmem:[%s1 + $0x60] sm:$0xff]
  %v42 = vld [vmem:[%s1 + $0x68] sm:$0xff]
  %v43 = vld [vmem:[%s1 + $0x70] sm:$0xff]
  %v44 = vld [vmem:[%s1 + $0x78] sm:$0xff]
  %v45 = vld [vmem:[%s1 + $0x80] sm:$0xff]
  %v46 = vld [vmem:[%s1 + $0x88] sm:$0xff]
  %v47 = vld [vmem:[%s1 + $0x90] sm:$0xff]
  %v48 = vld [vmem:[%s1 + $0x98] sm:$0xff]
  %v49 = vld [vmem:[%s1 + $0xa0] sm:$0xff]
  %v50 = vld [vmem:[%s1 + $0xa8] sm:$0xff]
  %v51 = vld [vmem:[%s1 + $0xb0] sm:$0xff]
  %v52 = vld [vmem:[%s1 + $0xb8] sm:$0xff]
  %v53 = vld [vmem:[%s1 + $0xc0] sm:$0xff]
  %v54 = vld [vmem:[%s1 + $0xc8] sm:$0xff]
  %v55 = vld [vmem:[%s1 + $0xd0] sm:$0xff]
  %v56 = vld [vmem:[%s1 + $0xd8] sm:$0xff]
  %v57 = vld [vmem:[%s1 + $0xe0] sm:$0xff]
  %v58 = vld [vmem:[%s1 + $0xe8] sm:$0xff]
  %v59 = vld [vmem:[%s1 + $0xf0] sm:$0xff]
  %v60 = vld [vmem:[%s1 + $0xf8] sm:$0xff]
  %v61 = vld [vmem:[%s1 + $0x100] sm:$0xff]
  %v62 = vld [vmem:[%s1 + $0x108] sm:$0xff]
  %v63 = vld [vmem:[%s1 + $0x110] sm:$0xff]
  %v64 = vld [vmem:[%s1 + $0x118] sm:$0xff]
  %v65 = vld [vmem:[%s1 + $0x120] sm:$0xff]
  %v66 = vld [vmem:[%s1 + $0x128] sm:$0xff]
  %v67 = vld [vmem:[%s1 + $0x130] sm:$0xff]
  %v68 = vld [vmem:[%s1 + $0x138] sm:$0xff]
  %v69 = vld [vmem:[%s1 + $0x140] sm:$0xff]
  %v70 = vld [vmem:[%s1 + $0x148] sm:$0xff]
  %v71 = vld [vmem:[%s1 + $0x150] sm:$0xff]
  %v72 = vld [vmem:[%s1 + $0x158] sm:$0xff]
  %v73 = vld [vmem:[%s1 + $0x160] sm:$0xff]
  %v74 = vld [vmem:[%s1 + $0x168] sm:$0xff]
  %v75 = vld [vmem:[%s1 + $0x170] sm:$0xff]
  %v76 = vld [vmem:[%s1 + $0x178] sm:$0xff]
  %v77 = vld [vmem:[%s1 + $0x180] sm:$0xff]
  %v78 = vld [vmem:[%s1 + $0x188] sm:$0xff]
  %v79 = vld [vmem:[%s1 + $0x190] sm:$0xff]
  %v80 = vld [vmem:[%s1 + $0x198] sm:$0xff]
  %v81 = vld [vmem:[%s1 + $0x1a0] sm:$0xff]
  %v82 = vld [vmem:[%s1 + $0x1a8] sm:$0xff]
  %v83 = vld [vmem:[%s1 + $0x1b0] sm:$0xff]
  %v84 = vld [vmem:[%s1 + $0x1b8] sm:$0xff]
  %v85 = vld [vmem:[%s1 + $0x1c0] sm:$0xff]
  %v86 = vld [vmem:[%s1 + $0x1c8] sm:$0xff]
  %v87 = vld [vmem:[%s1 + $0x1d0] sm:$0xff]
  %v88 = vld [vmem:[%s1 + $0x1d8] sm:$0xff]
  %v89 = vld [vmem:[%s1 + $0x1e0] sm:$0xff]
  %v90 = vld [vmem:[%s1 + $0x1e8] sm:$0xff]
  %v91 = vld [vmem:[%s1 + $0x1f0] sm:$0xff]
  %v92 = vld [vmem:[%s1 + $0x1f8] sm:$0xff]
  %v93 = vld [vmem:[%s1 + $0x200] sm:$0xff]
  %v94 = vld [vmem:[%s1 + $0x208] sm:$0xff]
  %v95 = vld [vmem:[%s1 + $0x210] sm:$0xff]
  %v96 = vld [vmem:[%s1 + $0x218] sm:$0xff]
  %v97 = vld [vmem:[%s1 + $0x220] sm:$0xff]
  %v98 = vld [vmem:[%s1 + $0x228] sm:$0xff]
  %v99 = vld [vmem:[%s1 + $0x230] sm:$0xff]
  %v100 = vld [vmem:[%s1 + $0x238] sm:$0xff]
  %v101 = vld [vmem:[%s1 + $0x240] sm:$0xff]
  %v102 = vld [vmem:[%s1 + $0x248] sm:$0xff]
  %v103 = vld [vmem:[%s1 + $0x250] sm:$0xff]
  %v104 = vld [vmem:[%s1 + $0x258] sm:$0xff]
  %v105 = vld [vmem:[%s1 + $0x260] sm:$0xff]
  %v106 = vld [vmem:[%s1 + $0x268] sm:$0xff]
  %v107 = vld [vmem:[%s1 + $0x270] sm:$0xff]
  %v108 = vld [vmem:[%s1 + $0x278] sm:$0xff]
  %v109 = vld [vmem:[%s1 + $0x280] sm:$0xff]
  %v110 = vld [vmem:[%s1 + $0x288] sm:$0xff]
  %v111 = vld [vmem:[%s1 + $0x290] sm:$0xff]
  %v112 = vld [vmem:[%s1 + $0x298] sm:$0xff]
  %v113 = vld [vmem:[%s1 + $0x2a0] sm:$0xff]
  %v114 = vld [vmem:[%s1 + $0x2a8] sm:$0xff]
  %v115 = vld [vmem:[%s1 + $0x2b0] sm:$0xff]
  %v116 = vld [vmem:[%s1 + $0x2b8] sm:$0xff]
  %v117 = vld [vmem:[%s1 + $0x2c0] sm:$0xff]
  %v118 = vld [vmem:[%s1 + $0x2c8] sm:$0xff]
  %v119 = vld [vmem:[%s1 + $0x2d0] sm:$0xff]
  %v120 = vld [vmem:[%s1 + $0x2d8] sm:$0xff]
  %v121 = vld [vmem:[%s1 + $0x2e0] sm:$0xff]
  %v122 = vld [vmem:[%s1 + $0x2e8] sm:$0xff]
  %v123 = vld [vmem:[%s1 + $0x2f0] sm:$0xff]
  %v124 = vld [vmem:[%s1 + $0x2f8] sm:$0xff]
  %v125 = vld [vmem:[%s1 + $0x300] sm:$0xff]
  %v126 = vld [vmem:[%s1 + $0x308] sm:$0xff]
  %v127 = vld [vmem:[%s1 + $0x310] sm:$0xff]
  %v128 = vld [vmem:[%s1 + $0x318] sm:$0xff]
  %v129 = vld [vmem:[%s1 + $0x320] sm:$0xff]
  %v130 = vld [vmem:[%s1 + $0x328] sm:$0xff]
  %v131 = vld [vmem:[%s1 + $0x330] sm:$0xff]
  %v132 = vld [vmem:[%s1 + $0x338] sm:$0xff]
  %v133 = vld [vmem:[%s1 + $0x340] sm:$0xff]
  %v134 = vld [vmem:[%s1 + $0x348] sm:$0xff]
  %v135 = vld [vmem:[%s1 + $0x350] sm:$0xff]
  %v136 = vld [vmem:[%s1 + $0x358] sm:$0xff]
  %v137 = vld [vmem:[%s1 + $0x360] sm:$0xff]
  %v138 = vld [vmem:[%s1 + $0x368] sm:$0xff]
  %v139 = vld [vmem:[%s1 + $0x370] sm:$0xff]
  %v140 = vld [vmem:[%s1 + $0x378] sm:$0xff]
  %v141 = vld [vmem:[%s1 + $0x380] sm:$0xff]
  %v142 = vld [vmem:[%s1 + $0x388] sm:$0xff]
  %v143 = vld [vmem:[%s1 + $0x390] sm:$0xff]
  %v144 = vld [vmem:[%s1 + $0x398] sm:$0xff]
  %v145 = vld [vmem:[%s1 + $0x3a0] sm:$0xff]
  %v146 = vld [vmem:[%s1 + $0x3a8] sm:$0xff]
  %v147 = vld [vmem:[%s1 + $0x3b0] sm:$0xff]
  %v148 = vld [vmem:[%s1 + $0x3b8] sm:$0xff]
  %v149 = vld [vmem:[%s1 + $0x3c0] sm:$0xff]
  %v150 = vld [vmem:[%s1 + $0x3c8] sm:$0xff]
  %v151 = vld [vmem:[%s1 + $0x3d0] sm:$0xff]
  %v152 = vld [vmem:[%s1 + $0x3d8] sm:$0xff]
  %v153 = vld [vmem:[%s1 + $0x3e0] sm:$0xff]
  %v154 = vld [vmem:[%s1 + $0x3e8] sm:$0xff]
  %v155 = vld [vmem:[%s1 + $0x3f0] sm:$0xff]
  %v156 = vld [vmem:[%s1 + $0x3f8] sm:$0xff]
  %v157 = vld [vmem:[%s2] sm:$0xf]
  %v159 = vlaneseq
  %v160 = vshrl.u32 %v159, 7
  %v161 = vsub.s32 0, %v160
  %v162 = vrot.slane %v157, %v161
  %v163 = vlaneseq
  %v164 = vshrl.u32 %v163, 7
  %v165 = vsub.s32 1, %v164
  %v166 = vrot.slane %v157, %v165
  %v167 = vlaneseq
  %v168 = vshrl.u32 %v167, 7
  %v169 = vsub.s32 2, %v168
  %v170 = vrot.slane %v157, %v169
  %v171 = vlaneseq
  %v172 = vshrl.u32 %v171, 7
  %v173 = vsub.s32 3, %v172
  %v174 = vrot.slane %v157, %v173
  %v181 = vunpack.c.l.b16 %v27
  %v182 = vunpack.c.h.b16 %v27
  %v183 = vunpack.c.l.b16 %v28
  %v184 = vunpack.c.h.b16 %v28
  %v185 = vpack.c.b16 %v181, %v181
  %v186 = vpack.c.b16 %v182, %v182
  %v187 = vpack.c.b16 %v183, %v183
  %v188 = vpack.c.b16 %v184, %v184
  %v321 = vunpack.c.l.b16 %v29
  %v322 = vunpack.c.h.b16 %v29
  %v323 = vunpack.c.l.b16 %v30
  %v324 = vunpack.c.h.b16 %v30
  %v325 = vunpack.c.l.b16 %v31
  %v326 = vunpack.c.h.b16 %v31
  %v327 = vunpack.c.l.b16 %v32
  %v328 = vunpack.c.h.b16 %v32
  %v329 = vunpack.c.l.b16 %v33
  %v330 = vunpack.c.h.b16 %v33
  %v331 = vunpack.c.l.b16 %v34
  %v332 = vunpack.c.h.b16 %v34
  %v333 = vunpack.c.l.b16 %v35
  %v334 = vunpack.c.h.b16 %v35
  %v335 = vunpack.c.l.b16 %v36
  %v336 = vunpack.c.h.b16 %v36
  %v337 = vunpack.c.l.b16 %v37
  %v338 = vunpack.c.h.b16 %v37
  %v339 = vunpack.c.l.b16 %v38
  %v340 = vunpack.c.h.b16 %v38
  %v341 = vunpack.c.l.b16 %v39
  %v342 = vunpack.c.h.b16 %v39
  %v343 = vunpack.c.l.b16 %v40
  %v344 = vunpack.c.h.b16 %v40
  %v345 = vunpack.c.l.b16 %v41
  %v346 = vunpack.c.h.b16 %v41
  %v347 = vunpack.c.l.b16 %v42
  %v348 = vunpack.c.h.b16 %v42
  %v349 = vunpack.c.l.b16 %v43
  %v350 = vunpack.c.h.b16 %v43
  %v351 = vunpack.c.l.b16 %v44
  %v352 = vunpack.c.h.b16 %v44
  %v353 = vunpack.c.l.b16 %v45
  %v354 = vunpack.c.h.b16 %v45
  %v355 = vunpack.c.l.b16 %v46
  %v356 = vunpack.c.h.b16 %v46
  %v357 = vunpack.c.l.b16 %v47
  %v358 = vunpack.c.h.b16 %v47
  %v359 = vunpack.c.l.b16 %v48
  %v360 = vunpack.c.h.b16 %v48
  %v361 = vunpack.c.l.b16 %v49
  %v362 = vunpack.c.h.b16 %v49
  %v363 = vunpack.c.l.b16 %v50
  %v364 = vunpack.c.h.b16 %v50
  %v365 = vunpack.c.l.b16 %v51
  %v366 = vunpack.c.h.b16 %v51
  %v367 = vunpack.c.l.b16 %v52
  %v368 = vunpack.c.h.b16 %v52
  %v369 = vunpack.c.l.b16 %v53
  %v370 = vunpack.c.h.b16 %v53
  %v371 = vunpack.c.l.b16 %v54
  %v372 = vunpack.c.h.b16 %v54
  %v373 = vunpack.c.l.b16 %v55
  %v374 = vunpack.c.h.b16 %v55
  %v375 = vunpack.c.l.b16 %v56
  %v376 = vunpack.c.h.b16 %v56
  %v377 = vunpack.c.l.b16 %v57
  %v378 = vunpack.c.h.b16 %v57
  %v379 = vunpack.c.l.b16 %v58
  %v380 = vunpack.c.h.b16 %v58
  %v381 = vunpack.c.l.b16 %v59
  %v382 = vunpack.c.h.b16 %v59
  %v383 = vunpack.c.l.b16 %v60
  %v384 = vunpack.c.h.b16 %v60
  %v385 = vunpack.c.l.b16 %v61
  %v386 = vunpack.c.h.b16 %v61
  %v387 = vunpack.c.l.b16 %v62
  %v388 = vunpack.c.h.b16 %v62
  %v389 = vunpack.c.l.b16 %v63
  %v390 = vunpack.c.h.b16 %v63
  %v391 = vunpack.c.l.b16 %v64
  %v392 = vunpack.c.h.b16 %v64
  %v393 = vunpack.c.l.b16 %v65
  %v394 = vunpack.c.h.b16 %v65
  %v395 = vunpack.c.l.b16 %v66
  %v396 = vunpack.c.h.b16 %v66
  %v397 = vunpack.c.l.b16 %v67
  %v398 = vunpack.c.h.b16 %v67
  %v399 = vunpack.c.l.b16 %v68
  %v400 = vunpack.c.h.b16 %v68
  %v401 = vunpack.c.l.b16 %v69
  %v402 = vunpack.c.h.b16 %v69
  %v403 = vunpack.c.l.b16 %v70
  %v404 = vunpack.c.h.b16 %v70
  %v405 = vunpack.c.l.b16 %v71
  %v406 = vunpack.c.h.b16 %v71
  %v407 = vunpack.c.l.b16 %v72
  %v408 = vunpack.c.h.b16 %v72
  %v409 = vunpack.c.l.b16 %v73
  %v410 = vunpack.c.h.b16 %v73
  %v411 = vunpack.c.l.b16 %v74
  %v412 = vunpack.c.h.b16 %v74
  %v413 = vunpack.c.l.b16 %v75
  %v414 = vunpack.c.h.b16 %v75
  %v415 = vunpack.c.l.b16 %v76
  %v416 = vunpack.c.h.b16 %v76
  %v417 = vunpack.c.l.b16 %v77
  %v418 = vunpack.c.h.b16 %v77
  %v419 = vunpack.c.l.b16 %v78
  %v420 = vunpack.c.h.b16 %v78
  %v421 = vunpack.c.l.b16 %v79
  %v422 = vunpack.c.h.b16 %v79
  %v423 = vunpack.c.l.b16 %v80
  %v424 = vunpack.c.h.b16 %v80
  %v425 = vunpack.c.l.b16 %v81
  %v426 = vunpack.c.h.b16 %v81
  %v427 = vunpack.c.l.b16 %v82
  %v428 = vunpack.c.h.b16 %v82
  %v429 = vunpack.c.l.b16 %v83
  %v430 = vunpack.c.h.b16 %v83
  %v431 = vunpack.c.l.b16 %v84
  %v432 = vunpack.c.h.b16 %v84
  %v433 = vunpack.c.l.b16 %v85
  %v434 = vunpack.c.h.b16 %v85
  %v435 = vunpack.c.l.b16 %v86
  %v436 = vunpack.c.h.b16 %v86
  %v437 = vunpack.c.l.b16 %v87
  %v438 = vunpack.c.h.b16 %v87
  %v439 = vunpack.c.l.b16 %v88
  %v440 = vunpack.c.h.b16 %v88
  %v441 = vunpack.c.l.b16 %v89
  %v442 = vunpack.c.h.b16 %v89
  %v443 = vunpack.c.l.b16 %v90
  %v444 = vunpack.c.h.b16 %v90
  %v445 = vunpack.c.l.b16 %v91
  %v446 = vunpack.c.h.b16 %v91
  %v447 = vunpack.c.l.b16 %v92
  %v448 = vunpack.c.h.b16 %v92
  %v449 = vunpack.c.l.b16 %v93
  %v450 = vunpack.c.h.b16 %v93
  %v451 = vunpack.c.l.b16 %v94
  %v452 = vunpack.c.h.b16 %v94
  %v453 = vunpack.c.l.b16 %v95
  %v454 = vunpack.c.h.b16 %v95
  %v455 = vunpack.c.l.b16 %v96
  %v456 = vunpack.c.h.b16 %v96
  %v457 = vunpack.c.l.b16 %v97
  %v458 = vunpack.c.h.b16 %v97
  %v459 = vunpack.c.l.b16 %v98
  %v460 = vunpack.c.h.b16 %v98
  %v461 = vunpack.c.l.b16 %v99
  %v462 = vunpack.c.h.b16 %v99
  %v463 = vunpack.c.l.b16 %v100
  %v464 = vunpack.c.h.b16 %v100
  %v465 = vunpack.c.l.b16 %v101
  %v466 = vunpack.c.h.b16 %v101
  %v467 = vunpack.c.l.b16 %v102
  %v468 = vunpack.c.h.b16 %v102
  %v469 = vunpack.c.l.b16 %v103
  %v470 = vunpack.c.h.b16 %v103
  %v471 = vunpack.c.l.b16 %v104
  %v472 = vunpack.c.h.b16 %v104
  %v473 = vunpack.c.l.b16 %v105
  %v474 = vunpack.c.h.b16 %v105
  %v475 = vunpack.c.l.b16 %v106
  %v476 = vunpack.c.h.b16 %v106
  %v477 = vunpack.c.l.b16 %v107
  %v478 = vunpack.c.h.b16 %v107
  %v479 = vunpack.c.l.b16 %v108
  %v480 = vunpack.c.h.b16 %v108
  %v481 = vunpack.c.l.b16 %v109
  %v482 = vunpack.c.h.b16 %v109
  %v483 = vunpack.c.l.b16 %v110
  %v484 = vunpack.c.h.b16 %v110
  %v485 = vunpack.c.l.b16 %v111
  %v486 = vunpack.c.h.b16 %v111
  %v487 = vunpack.c.l.b16 %v112
  %v488 = vunpack.c.h.b16 %v112
  %v489 = vunpack.c.l.b16 %v113
  %v490 = vunpack.c.h.b16 %v113
  %v491 = vunpack.c.l.b16 %v114
  %v492 = vunpack.c.h.b16 %v114
  %v493 = vunpack.c.l.b16 %v115
  %v494 = vunpack.c.h.b16 %v115
  %v495 = vunpack.c.l.b16 %v116
  %v496 = vunpack.c.h.b16 %v116
  %v497 = vunpack.c.l.b16 %v117
  %v498 = vunpack.c.h.b16 %v117
  %v499 = vunpack.c.l.b16 %v118
  %v500 = vunpack.c.h.b16 %v118
  %v501 = vunpack.c.l.b16 %v119
  %v502 = vunpack.c.h.b16 %v119
  %v503 = vunpack.c.l.b16 %v120
  %v504 = vunpack.c.h.b16 %v120
  %v505 = vunpack.c.l.b16 %v121
  %v506 = vunpack.c.h.b16 %v121
  %v507 = vunpack.c.l.b16 %v122
  %v508 = vunpack.c.h.b16 %v122
  %v509 = vunpack.c.l.b16 %v123
  %v510 = vunpack.c.h.b16 %v123
  %v511 = vunpack.c.l.b16 %v124
  %v512 = vunpack.c.h.b16 %v124
  %v513 = vunpack.c.l.b16 %v125
  %v514 = vunpack.c.h.b16 %v125
  %v515 = vunpack.c.l.b16 %v126
  %v516 = vunpack.c.h.b16 %v126
  %v517 = vunpack.c.l.b16 %v127
  %v518 = vunpack.c.h.b16 %v127
  %v519 = vunpack.c.l.b16 %v128
  %v520 = vunpack.c.h.b16 %v128
  %v521 = vunpack.c.l.b16 %v129
  %v522 = vunpack.c.h.b16 %v129
  %v523 = vunpack.c.l.b16 %v130
  %v524 = vunpack.c.h.b16 %v130
  %v525 = vunpack.c.l.b16 %v131
  %v526 = vunpack.c.h.b16 %v131
  %v527 = vunpack.c.l.b16 %v132
  %v528 = vunpack.c.h.b16 %v132
  %v529 = vunpack.c.l.b16 %v133
  %v530 = vunpack.c.h.b16 %v133
  %v531 = vunpack.c.l.b16 %v134
  %v532 = vunpack.c.h.b16 %v134
  %v533 = vunpack.c.l.b16 %v135
  %v534 = vunpack.c.h.b16 %v135
  %v535 = vunpack.c.l.b16 %v136
  %v536 = vunpack.c.h.b16 %v136
  %v537 = vunpack.c.l.b16 %v137
  %v538 = vunpack.c.h.b16 %v137
  %v539 = vunpack.c.l.b16 %v138
  %v540 = vunpack.c.h.b16 %v138
  %v541 = vunpack.c.l.b16 %v139
  %v542 = vunpack.c.h.b16 %v139
  %v543 = vunpack.c.l.b16 %v140
  %v544 = vunpack.c.h.b16 %v140
  %v545 = vunpack.c.l.b16 %v141
  %v546 = vunpack.c.h.b16 %v141
  %v547 = vunpack.c.l.b16 %v142
  %v548 = vunpack.c.h.b16 %v142
  %v549 = vunpack.c.l.b16 %v143
  %v550 = vunpack.c.h.b16 %v143
  %v551 = vunpack.c.l.b16 %v144
  %v552 = vunpack.c.h.b16 %v144
  %v553 = vunpack.c.l.b16 %v145
  %v554 = vunpack.c.h.b16 %v145
  %v555 = vunpack.c.l.b16 %v146
  %v556 = vunpack.c.h.b16 %v146
  %v557 = vunpack.c.l.b16 %v147
  %v558 = vunpack.c.h.b16 %v147
  %v559 = vunpack.c.l.b16 %v148
  %v560 = vunpack.c.h.b16 %v148
  %v561 = vunpack.c.l.b16 %v149
  %v562 = vunpack.c.h.b16 %v149
  %v563 = vunpack.c.l.b16 %v150
  %v564 = vunpack.c.h.b16 %v150
  %v565 = vunpack.c.l.b16 %v151
  %v566 = vunpack.c.h.b16 %v151
  %v567 = vunpack.c.l.b16 %v152
  %v568 = vunpack.c.h.b16 %v152
  %v569 = vunpack.c.l.b16 %v153
  %v570 = vunpack.c.h.b16 %v153
  %v571 = vunpack.c.l.b16 %v154
  %v572 = vunpack.c.h.b16 %v154
  %v573 = vunpack.c.l.b16 %v155
  %v574 = vunpack.c.h.b16 %v155
  %v575 = vunpack.c.l.b16 %v156
  %v576 = vunpack.c.h.b16 %v156
  %v577 = vpack.c.b16 %v325, %v321
  %v578 = vpack.c.b16 %v326, %v322
  %v579 = vpack.c.b16 %v327, %v323
  %v580 = vpack.c.b16 %v328, %v324
  %v581 = vpack.c.b16 %v333, %v329
  %v582 = vpack.c.b16 %v334, %v330
  %v583 = vpack.c.b16 %v335, %v331
  %v584 = vpack.c.b16 %v336, %v332
  %v585 = vpack.c.b16 %v341, %v337
  %v586 = vpack.c.b16 %v342, %v338
  %v587 = vpack.c.b16 %v343, %v339
  %v588 = vpack.c.b16 %v344, %v340
  %v589 = vpack.c.b16 %v349, %v345
  %v590 = vpack.c.b16 %v350, %v346
  %v591 = vpack.c.b16 %v351, %v347
  %v592 = vpack.c.b16 %v352, %v348
  %v593 = vpack.c.b16 %v357, %v353
  %v594 = vpack.c.b16 %v358, %v354
  %v595 = vpack.c.b16 %v359, %v355
  %v596 = vpack.c.b16 %v360, %v356
  %v597 = vpack.c.b16 %v365, %v361
  %v598 = vpack.c.b16 %v366, %v362
  %v599 = vpack.c.b16 %v367, %v363
  %v600 = vpack.c.b16 %v368, %v364
  %v601 = vpack.c.b16 %v373, %v369
  %v602 = vpack.c.b16 %v374, %v370
  %v603 = vpack.c.b16 %v375, %v371
  %v604 = vpack.c.b16 %v376, %v372
  %v605 = vpack.c.b16 %v381, %v377
  %v606 = vpack.c.b16 %v382, %v378
  %v607 = vpack.c.b16 %v383, %v379
  %v608 = vpack.c.b16 %v384, %v380
  %v609 = vpack.c.b16 %v389, %v385
  %v610 = vpack.c.b16 %v390, %v386
  %v611 = vpack.c.b16 %v391, %v387
  %v612 = vpack.c.b16 %v392, %v388
  %v613 = vpack.c.b16 %v397, %v393
  %v614 = vpack.c.b16 %v398, %v394
  %v615 = vpack.c.b16 %v399, %v395
  %v616 = vpack.c.b16 %v400, %v396
  %v617 = vpack.c.b16 %v405, %v401
  %v618 = vpack.c.b16 %v406, %v402
  %v619 = vpack.c.b16 %v407, %v403
  %v620 = vpack.c.b16 %v408, %v404
  %v621 = vpack.c.b16 %v413, %v409
  %v622 = vpack.c.b16 %v414, %v410
  %v623 = vpack.c.b16 %v415, %v411
  %v624 = vpack.c.b16 %v416, %v412
  %v625 = vpack.c.b16 %v421, %v417
  %v626 = vpack.c.b16 %v422, %v418
  %v627 = vpack.c.b16 %v423, %v419
  %v628 = vpack.c.b16 %v424, %v420
  %v629 = vpack.c.b16 %v429, %v425
  %v630 = vpack.c.b16 %v430, %v426
  %v631 = vpack.c.b16 %v431, %v427
  %v632 = vpack.c.b16 %v432, %v428
  %v633 = vpack.c.b16 %v437, %v433
  %v634 = vpack.c.b16 %v438, %v434
  %v635 = vpack.c.b16 %v439, %v435
  %v636 = vpack.c.b16 %v440, %v436
  %v637 = vpack.c.b16 %v445, %v441
  %v638 = vpack.c.b16 %v446, %v442
  %v639 = vpack.c.b16 %v447, %v443
  %v640 = vpack.c.b16 %v448, %v444
  %v641 = vpack.c.b16 %v453, %v449
  %v642 = vpack.c.b16 %v454, %v450
  %v643 = vpack.c.b16 %v455, %v451
  %v644 = vpack.c.b16 %v456, %v452
  %v645 = vpack.c.b16 %v461, %v457
  %v646 = vpack.c.b16 %v462, %v458
  %v647 = vpack.c.b16 %v463, %v459
  %v648 = vpack.c.b16 %v464, %v460
  %v649 = vpack.c.b16 %v469, %v465
  %v650 = vpack.c.b16 %v470, %v466
  %v651 = vpack.c.b16 %v471, %v467
  %v652 = vpack.c.b16 %v472, %v468
  %v653 = vpack.c.b16 %v477, %v473
  %v654 = vpack.c.b16 %v478, %v474
  %v655 = vpack.c.b16 %v479, %v475
  %v656 = vpack.c.b16 %v480, %v476
  %v657 = vpack.c.b16 %v485, %v481
  %v658 = vpack.c.b16 %v486, %v482
  %v659 = vpack.c.b16 %v487, %v483
  %v660 = vpack.c.b16 %v488, %v484
  %v661 = vpack.c.b16 %v493, %v489
  %v662 = vpack.c.b16 %v494, %v490
  %v663 = vpack.c.b16 %v495, %v491
  %v664 = vpack.c.b16 %v496, %v492
  %v665 = vpack.c.b16 %v501, %v497
  %v666 = vpack.c.b16 %v502, %v498
  %v667 = vpack.c.b16 %v503, %v499
  %v668 = vpack.c.b16 %v504, %v500
  %v669 = vpack.c.b16 %v509, %v505
  %v670 = vpack.c.b16 %v510, %v506
  %v671 = vpack.c.b16 %v511, %v507
  %v672 = vpack.c.b16 %v512, %v508
  %v673 = vpack.c.b16 %v517, %v513
  %v674 = vpack.c.b16 %v518, %v514
  %v675 = vpack.c.b16 %v519, %v515
  %v676 = vpack.c.b16 %v520, %v516
  %v677 = vpack.c.b16 %v525, %v521
  %v678 = vpack.c.b16 %v526, %v522
  %v679 = vpack.c.b16 %v527, %v523
  %v680 = vpack.c.b16 %v528, %v524
  %v681 = vpack.c.b16 %v533, %v529
  %v682 = vpack.c.b16 %v534, %v530
  %v683 = vpack.c.b16 %v535, %v531
  %v684 = vpack.c.b16 %v536, %v532
  %v685 = vpack.c.b16 %v541, %v537
  %v686 = vpack.c.b16 %v542, %v538
  %v687 = vpack.c.b16 %v543, %v539
  %v688 = vpack.c.b16 %v544, %v540
  %v689 = vpack.c.b16 %v549, %v545
  %v690 = vpack.c.b16 %v550, %v546
  %v691 = vpack.c.b16 %v551, %v547
  %v692 = vpack.c.b16 %v552, %v548
  %v693 = vpack.c.b16 %v557, %v553
  %v694 = vpack.c.b16 %v558, %v554
  %v695 = vpack.c.b16 %v559, %v555
  %v696 = vpack.c.b16 %v560, %v556
  %v697 = vpack.c.b16 %v565, %v561
  %v698 = vpack.c.b16 %v566, %v562
  %v699 = vpack.c.b16 %v567, %v563
  %v700 = vpack.c.b16 %v568, %v564
  %v701 = vpack.c.b16 %v573, %v569
  %v702 = vpack.c.b16 %v574, %v570
  %v703 = vpack.c.b16 %v575, %v571
  %v704 = vpack.c.b16 %v576, %v572
  %833 = vmatprep.subr.bf16.mxu0 %v606
  %834 = vmatpush1.bf16.msra.mxu0 %v605
  %835 = vmatprep.subr.bf16.mxu0 %v602
  %836 = vmatpush1.bf16.msra.mxu0 %v601
  %837 = vmatprep.subr.bf16.mxu0 %v598
  %838 = vmatpush1.bf16.msra.mxu0 %v597
  %839 = vmatprep.subr.bf16.mxu0 %v594
  %840 = vmatpush1.bf16.msra.mxu0 %v593
  %841 = vmatprep.subr.bf16.mxu0 %v590
  %842 = vmatpush1.bf16.msra.mxu0 %v589
  %843 = vmatprep.subr.bf16.mxu0 %v586
  %844 = vmatpush1.bf16.msra.mxu0 %v585
  %845 = vmatprep.subr.bf16.mxu0 %v582
  %846 = vmatpush1.bf16.msra.mxu0 %v581
  %847 = vmatprep.subr.bf16.mxu0 %v578
  %848 = vmatpush1.bf16.msra.mxu0 %v577
  %849 = vmatprep.subr.bf16.mxu0 %v638
  %850 = vmatpush2.bf16.msra.mxu0 %v637
  %851 = vmatprep.subr.bf16.mxu0 %v634
  %852 = vmatpush2.bf16.msra.mxu0 %v633
  %853 = vmatprep.subr.bf16.mxu0 %v630
  %854 = vmatpush2.bf16.msra.mxu0 %v629
  %855 = vmatprep.subr.bf16.mxu0 %v626
  %856 = vmatpush2.bf16.msra.mxu0 %v625
  %857 = vmatprep.subr.bf16.mxu0 %v622
  %858 = vmatpush2.bf16.msra.mxu0 %v621
  %859 = vmatprep.subr.bf16.mxu0 %v618
  %860 = vmatpush2.bf16.msra.mxu0 %v617
  %861 = vmatprep.subr.bf16.mxu0 %v614
  %862 = vmatpush2.bf16.msra.mxu0 %v613
  %863 = vmatprep.subr.bf16.mxu0 %v610
  %864 = vmatpush2.bf16.msra.mxu0 %v609
  %865 = vmatprep.mubr.bf16.mxu0 %v186
  %866 = vmatmul.mubr.bf16.gmra.mxu0 %v185
  %v867 = vpop.f32.mrf.mxu0
  %v868 = vadd.f32 %v162, %v867
  %v869 = vpop.f32.mrf.mxu0
  %v870 = vadd.f32 %v166, %v869
  %v871 = vpop.f32.mrf.mxu0
  %v872 = vpop.f32.mrf.mxu0
  %873 = vdwg.mxu0
  %874 = vmatprep.subr.bf16.mxu0 %v670
  %875 = vmatpush1.bf16.msra.mxu0 %v669
  %876 = vmatprep.subr.bf16.mxu0 %v666
  %877 = vmatpush1.bf16.msra.mxu0 %v665
  %878 = vmatprep.subr.bf16.mxu0 %v662
  %879 = vmatpush1.bf16.msra.mxu0 %v661
  %880 = vmatprep.subr.bf16.mxu0 %v658
  %881 = vmatpush1.bf16.msra.mxu0 %v657
  %882 = vmatprep.subr.bf16.mxu0 %v654
  %883 = vmatpush1.bf16.msra.mxu0 %v653
  %884 = vmatprep.subr.bf16.mxu0 %v650
  %885 = vmatpush1.bf16.msra.mxu0 %v649
  %886 = vmatprep.subr.bf16.mxu0 %v646
  %887 = vmatpush1.bf16.msra.mxu0 %v645
  %888 = vmatprep.subr.bf16.mxu0 %v642
  %889 = vmatpush1.bf16.msra.mxu0 %v641
  %890 = vmatprep.subr.bf16.mxu0 %v702
  %891 = vmatpush2.bf16.msra.mxu0 %v701
  %892 = vmatprep.subr.bf16.mxu0 %v698
  %893 = vmatpush2.bf16.msra.mxu0 %v697
  %894 = vmatprep.subr.bf16.mxu0 %v694
  %895 = vmatpush2.bf16.msra.mxu0 %v693
  %896 = vmatprep.subr.bf16.mxu0 %v690
  %897 = vmatpush2.bf16.msra.mxu0 %v689
  %898 = vmatprep.subr.bf16.mxu0 %v686
  %899 = vmatpush2.bf16.msra.mxu0 %v685
  %900 = vmatprep.subr.bf16.mxu0 %v682
  %901 = vmatpush2.bf16.msra.mxu0 %v681
  %902 = vmatprep.subr.bf16.mxu0 %v678
  %903 = vmatpush2.bf16.msra.mxu0 %v677
  %904 = vmatprep.subr.bf16.mxu0 %v674
  %905 = vmatpush2.bf16.msra.mxu0 %v673
  %906 = vmatprep.mubr.bf16.mxu0 %v188
  %907 = vmatmul.mubr.bf16.gmra.mxu0 %v187
  %v908 = vpop.f32.mrf.mxu0
  %v909 = vadd.f32 %v868, %v908
  %v910 = vpop.f32.mrf.mxu0
  %v911 = vadd.f32 %v870, %v910
  %v912 = vpop.f32.mrf.mxu0
  %v913 = vpop.f32.mrf.mxu0
  %914 = vdwg.mxu0
  %915 = vmatprep.subr.bf16.mxu0 %v608
  %916 = vmatpush1.bf16.msra.mxu0 %v607
  %917 = vmatprep.subr.bf16.mxu0 %v604
  %918 = vmatpush1.bf16.msra.mxu0 %v603
  %919 = vmatprep.subr.bf16.mxu0 %v600
  %920 = vmatpush1.bf16.msra.mxu0 %v599
  %921 = vmatprep.subr.bf16.mxu0 %v596
  %922 = vmatpush1.bf16.msra.mxu0 %v595
  %923 = vmatprep.subr.bf16.mxu0 %v592
  %924 = vmatpush1.bf16.msra.mxu0 %v591
  %925 = vmatprep.subr.bf16.mxu0 %v588
  %926 = vmatpush1.bf16.msra.mxu0 %v587
  %927 = vmatprep.subr.bf16.mxu0 %v584
  %928 = vmatpush1.bf16.msra.mxu0 %v583
  %929 = vmatprep.subr.bf16.mxu0 %v580
  %930 = vmatpush1.bf16.msra.mxu0 %v579
  %931 = vmatprep.subr.bf16.mxu0 %v640
  %932 = vmatpush2.bf16.msra.mxu0 %v639
  %933 = vmatprep.subr.bf16.mxu0 %v636
  %934 = vmatpush2.bf16.msra.mxu0 %v635
  %935 = vmatprep.subr.bf16.mxu0 %v632
  %936 = vmatpush2.bf16.msra.mxu0 %v631
  %937 = vmatprep.subr.bf16.mxu0 %v628
  %938 = vmatpush2.bf16.msra.mxu0 %v627
  %939 = vmatprep.subr.bf16.mxu0 %v624
  %940 = vmatpush2.bf16.msra.mxu0 %v623
  %941 = vmatprep.subr.bf16.mxu0 %v620
  %942 = vmatpush2.bf16.msra.mxu0 %v619
  %943 = vmatprep.subr.bf16.mxu0 %v616
  %944 = vmatpush2.bf16.msra.mxu0 %v615
  %945 = vmatprep.subr.bf16.mxu0 %v612
  %946 = vmatpush2.bf16.msra.mxu0 %v611
  %947 = vmatprep.mubr.bf16.mxu0 %v186
  %948 = vmatmul.mubr.bf16.gmra.mxu0 %v185
  %v949 = vpop.f32.mrf.mxu0
  %v950 = vadd.f32 %v170, %v949
  %v951 = vpop.f32.mrf.mxu0
  %v952 = vadd.f32 %v174, %v951
  %v953 = vpop.f32.mrf.mxu0
  %v954 = vpop.f32.mrf.mxu0
  %955 = vdwg.mxu0
  %956 = vmatprep.subr.bf16.mxu0 %v672
  %957 = vmatpush1.bf16.msra.mxu0 %v671
  %958 = vmatprep.subr.bf16.mxu0 %v668
  %959 = vmatpush1.bf16.msra.mxu0 %v667
  %960 = vmatprep.subr.bf16.mxu0 %v664
  %961 = vmatpush1.bf16.msra.mxu0 %v663
  %962 = vmatprep.subr.bf16.mxu0 %v660
  %963 = vmatpush1.bf16.msra.mxu0 %v659
  %964 = vmatprep.subr.bf16.mxu0 %v656
  %965 = vmatpush1.bf16.msra.mxu0 %v655
  %966 = vmatprep.subr.bf16.mxu0 %v652
  %967 = vmatpush1.bf16.msra.mxu0 %v651
  %968 = vmatprep.subr.bf16.mxu0 %v648
  %969 = vmatpush1.bf16.msra.mxu0 %v647
  %970 = vmatprep.subr.bf16.mxu0 %v644
  %971 = vmatpush1.bf16.msra.mxu0 %v643
  %972 = vmatprep.subr.bf16.mxu0 %v704
  %973 = vmatpush2.bf16.msra.mxu0 %v703
  %974 = vmatprep.subr.bf16.mxu0 %v700
  %975 = vmatpush2.bf16.msra.mxu0 %v699
  %976 = vmatprep.subr.bf16.mxu0 %v696
  %977 = vmatpush2.bf16.msra.mxu0 %v695
  %978 = vmatprep.subr.bf16.mxu0 %v692
  %979 = vmatpush2.bf16.msra.mxu0 %v691
  %980 = vmatprep.subr.bf16.mxu0 %v688
  %981 = vmatpush2.bf16.msra.mxu0 %v687
  %982 = vmatprep.subr.bf16.mxu0 %v684
  %983 = vmatpush2.bf16.msra.mxu0 %v683
  %984 = vmatprep.subr.bf16.mxu0 %v680
  %985 = vmatpush2.bf16.msra.mxu0 %v679
  %986 = vmatprep.subr.bf16.mxu0 %v676
  %987 = vmatpush2.bf16.msra.mxu0 %v675
  %988 = vmatprep.mubr.bf16.mxu0 %v188
  %989 = vmatmul.mubr.bf16.gmra.mxu0 %v187
  %v990 = vpop.f32.mrf.mxu0
  %v991 = vadd.f32 %v950, %v990
  %v992 = vpop.f32.mrf.mxu0
  %v993 = vadd.f32 %v952, %v992
  %v994 = vpop.f32.mrf.mxu0
  %v995 = vpop.f32.mrf.mxu0
  %996 = vdwg.mxu0
  %vm997 = vcmp.gt.f32.partialorder %v909, 0.0
  %vm998 = vcmp.gt.f32.partialorder %v911, 0.0
  %vm999 = vcmp.gt.f32.partialorder %v991, 0.0
  %vm1000 = vcmp.gt.f32.partialorder %v993, 0.0
  %v1001 = vmin.f32 %v909, 0.0
  %v1002 = vmin.f32 %v911, 0.0
  %v1003 = vmin.f32 %v991, 0.0
  %v1004 = vmin.f32 %v993, 0.0
  %v1005 = vmul.f32 %v1001, 1.442695
  %v1006 = vpow.pop %v1005
  %v1007 = vmul.f32 %v1002, 1.442695
  %v1008 = vpow.pop %v1007
  %v1009 = vmul.f32 %v1003, 1.442695
  %v1010 = vpow.pop %v1009
  %v1011 = vmul.f32 %v1004, 1.442695
  %v1012 = vpow.pop %v1011
  %v1013 = vsub.f32 %v1006, 1.0
  %v1014 = vsub.f32 %v1008, 1.0
  %v1015 = vsub.f32 %v1010, 1.0
  %v1016 = vsub.f32 %v1012, 1.0
  %v1017 = vsel %vm997, %v909, %v1013
  %v1018 = vsel %vm998, %v911, %v1014
  %v1019 = vsel %vm999, %v991, %v1015
  %v1020 = vsel %vm1000, %v993, %v1016
  %v1021 = vpack.c.bf16 %v1017, %v1017
  %v1022 = vpack.c.bf16 %v1018, %v1018
  %v1023 = vpack.c.bf16 %v1019, %v1019
  %v1024 = vpack.c.bf16 %v1020, %v1020
  %v1025 = vld [vmem:[%s3] sm:$0xf]
  %v1026 = vld [vmem:[%s3 + $0x4] sm:$0xf]
  %v1027 = vld [vmem:[%s3 + $0x8] sm:$0xf]
  %v1028 = vld [vmem:[%s3 + $0xc] sm:$0xf]
  %v1029 = vld [vmem:[%s3 + $0x10] sm:$0xf]
  %v1030 = vld [vmem:[%s3 + $0x14] sm:$0xf]
  %v1031 = vld [vmem:[%s3 + $0x18] sm:$0xf]
  %v1032 = vld [vmem:[%s3 + $0x1c] sm:$0xf]
  %v1033 = vld [vmem:[%s3 + $0x20] sm:$0xf]
  %v1034 = vld [vmem:[%s3 + $0x24] sm:$0xf]
  %v1035 = vld [vmem:[%s3 + $0x28] sm:$0xf]
  %v1036 = vld [vmem:[%s3 + $0x2c] sm:$0xf]
  %v1037 = vld [vmem:[%s3 + $0x30] sm:$0xf]
  %v1038 = vld [vmem:[%s3 + $0x34] sm:$0xf]
  %v1039 = vld [vmem:[%s3 + $0x38] sm:$0xf]
  %v1040 = vld [vmem:[%s3 + $0x3c] sm:$0xf]
  %v1041 = vld [vmem:[%s3 + $0x40] sm:$0xf]
  %v1042 = vld [vmem:[%s3 + $0x44] sm:$0xf]
  %v1043 = vld [vmem:[%s3 + $0x48] sm:$0xf]
  %v1044 = vld [vmem:[%s3 + $0x4c] sm:$0xf]
  %v1045 = vld [vmem:[%s3 + $0x50] sm:$0xf]
  %v1046 = vld [vmem:[%s3 + $0x54] sm:$0xf]
  %v1047 = vld [vmem:[%s3 + $0x58] sm:$0xf]
  %v1048 = vld [vmem:[%s3 + $0x5c] sm:$0xf]
  %v1049 = vld [vmem:[%s3 + $0x60] sm:$0xf]
  %v1050 = vld [vmem:[%s3 + $0x64] sm:$0xf]
  %v1051 = vld [vmem:[%s3 + $0x68] sm:$0xf]
  %v1052 = vld [vmem:[%s3 + $0x6c] sm:$0xf]
  %v1053 = vld [vmem:[%s3 + $0x70] sm:$0xf]
  %v1054 = vld [vmem:[%s3 + $0x74] sm:$0xf]
  %v1055 = vld [vmem:[%s3 + $0x78] sm:$0xf]
  %v1056 = vld [vmem:[%s3 + $0x7c] sm:$0xf]
  %v1057 = vld [vmem:[%s3 + $0x80] sm:$0xf]
  %v1058 = vld [vmem:[%s3 + $0x84] sm:$0xf]
  %v1059 = vld [vmem:[%s3 + $0x88] sm:$0xf]
  %v1060 = vld [vmem:[%s3 + $0x8c] sm:$0xf]
  %v1061 = vld [vmem:[%s3 + $0x90] sm:$0xf]
  %v1062 = vld [vmem:[%s3 + $0x94] sm:$0xf]
  %v1063 = vld [vmem:[%s3 + $0x98] sm:$0xf]
  %v1064 = vld [vmem:[%s3 + $0x9c] sm:$0xf]
  %v1065 = vld [vmem:[%s3 + $0xa0] sm:$0xf]
  %v1066 = vld [vmem:[%s3 + $0xa4] sm:$0xf]
  %v1067 = vld [vmem:[%s3 + $0xa8] sm:$0xf]
  %v1068 = vld [vmem:[%s3 + $0xac] sm:$0xf]
  %v1069 = vld [vmem:[%s3 + $0xb0] sm:$0xf]
  %v1070 = vld [vmem:[%s3 + $0xb4] sm:$0xf]
  %v1071 = vld [vmem:[%s3 + $0xb8] sm:$0xf]
  %v1072 = vld [vmem:[%s3 + $0xbc] sm:$0xf]
  %v1073 = vld [vmem:[%s3 + $0xc0] sm:$0xf]
  %v1074 = vld [vmem:[%s3 + $0xc4] sm:$0xf]
  %v1075 = vld [vmem:[%s3 + $0xc8] sm:$0xf]
  %v1076 = vld [vmem:[%s3 + $0xcc] sm:$0xf]
  %v1077 = vld [vmem:[%s3 + $0xd0] sm:$0xf]
  %v1078 = vld [vmem:[%s3 + $0xd4] sm:$0xf]
  %v1079 = vld [vmem:[%s3 + $0xd8] sm:$0xf]
  %v1080 = vld [vmem:[%s3 + $0xdc] sm:$0xf]
  %v1081 = vld [vmem:[%s3 + $0xe0] sm:$0xf]
  %v1082 = vld [vmem:[%s3 + $0xe4] sm:$0xf]
  %v1083 = vld [vmem:[%s3 + $0xe8] sm:$0xf]
  %v1084 = vld [vmem:[%s3 + $0xec] sm:$0xf]
  %v1085 = vld [vmem:[%s3 + $0xf0] sm:$0xf]
  %v1086 = vld [vmem:[%s3 + $0xf4] sm:$0xf]
  %v1087 = vld [vmem:[%s3 + $0xf8] sm:$0xf]
  %v1088 = vld [vmem:[%s3 + $0xfc] sm:$0xf]
  %v1089 = vld [vmem:[%s4] sm:$0x1]
  %v1091 = vlaneseq
  %v1092 = vshrl.u32 %v1091, 7
  %v1093 = vsub.s32 0, %v1092
  %v1094 = vrot.slane %v1089, %v1093
  %v1160 = vunpack.c.l.b16 %v1025
  %v1161 = vunpack.c.l.b16 %v1026
  %v1162 = vunpack.c.l.b16 %v1027
  %v1163 = vunpack.c.l.b16 %v1028
  %v1164 = vunpack.c.l.b16 %v1029
  %v1165 = vunpack.c.l.b16 %v1030
  %v1166 = vunpack.c.l.b16 %v1031
  %v1167 = vunpack.c.l.b16 %v1032
  %v1168 = vunpack.c.l.b16 %v1033
  %v1169 = vunpack.c.l.b16 %v1034
  %v1170 = vunpack.c.l.b16 %v1035
  %v1171 = vunpack.c.l.b16 %v1036
  %v1172 = vunpack.c.l.b16 %v1037
  %v1173 = vunpack.c.l.b16 %v1038
  %v1174 = vunpack.c.l.b16 %v1039
  %v1175 = vunpack.c.l.b16 %v1040
  %v1176 = vunpack.c.l.b16 %v1041
  %v1177 = vunpack.c.l.b16 %v1042
  %v1178 = vunpack.c.l.b16 %v1043
  %v1179 = vunpack.c.l.b16 %v1044
  %v1180 = vunpack.c.l.b16 %v1045
  %v1181 = vunpack.c.l.b16 %v1046
  %v1182 = vunpack.c.l.b16 %v1047
  %v1183 = vunpack.c.l.b16 %v1048
  %v1184 = vunpack.c.l.b16 %v1049
  %v1185 = vunpack.c.l.b16 %v1050
  %v1186 = vunpack.c.l.b16 %v1051
  %v1187 = vunpack.c.l.b16 %v1052
  %v1188 = vunpack.c.l.b16 %v1053
  %v1189 = vunpack.c.l.b16 %v1054
  %v1190 = vunpack.c.l.b16 %v1055
  %v1191 = vunpack.c.l.b16 %v1056
  %v1192 = vunpack.c.l.b16 %v1057
  %v1193 = vunpack.c.l.b16 %v1058
  %v1194 = vunpack.c.l.b16 %v1059
  %v1195 = vunpack.c.l.b16 %v1060
  %v1196 = vunpack.c.l.b16 %v1061
  %v1197 = vunpack.c.l.b16 %v1062
  %v1198 = vunpack.c.l.b16 %v1063
  %v1199 = vunpack.c.l.b16 %v1064
  %v1200 = vunpack.c.l.b16 %v1065
  %v1201 = vunpack.c.l.b16 %v1066
  %v1202 = vunpack.c.l.b16 %v1067
  %v1203 = vunpack.c.l.b16 %v1068
  %v1204 = vunpack.c.l.b16 %v1069
  %v1205 = vunpack.c.l.b16 %v1070
  %v1206 = vunpack.c.l.b16 %v1071
  %v1207 = vunpack.c.l.b16 %v1072
  %v1208 = vunpack.c.l.b16 %v1073
  %v1209 = vunpack.c.l.b16 %v1074
  %v1210 = vunpack.c.l.b16 %v1075
  %v1211 = vunpack.c.l.b16 %v1076
  %v1212 = vunpack.c.l.b16 %v1077
  %v1213 = vunpack.c.l.b16 %v1078
  %v1214 = vunpack.c.l.b16 %v1079
  %v1215 = vunpack.c.l.b16 %v1080
  %v1216 = vunpack.c.l.b16 %v1081
  %v1217 = vunpack.c.l.b16 %v1082
  %v1218 = vunpack.c.l.b16 %v1083
  %v1219 = vunpack.c.l.b16 %v1084
  %v1220 = vunpack.c.l.b16 %v1085
  %v1221 = vunpack.c.l.b16 %v1086
  %v1222 = vunpack.c.l.b16 %v1087
  %v1223 = vunpack.c.l.b16 %v1088
  %v1224 = vpack.c.b16 %v1161, %v1160
  %v1225 = vpack.c.b16 %v1163, %v1162
  %v1226 = vpack.c.b16 %v1165, %v1164
  %v1227 = vpack.c.b16 %v1167, %v1166
  %v1228 = vpack.c.b16 %v1169, %v1168
  %v1229 = vpack.c.b16 %v1171, %v1170
  %v1230 = vpack.c.b16 %v1173, %v1172
  %v1231 = vpack.c.b16 %v1175, %v1174
  %v1232 = vpack.c.b16 %v1177, %v1176
  %v1233 = vpack.c.b16 %v1179, %v1178
  %v1234 = vpack.c.b16 %v1181, %v1180
  %v1235 = vpack.c.b16 %v1183, %v1182
  %v1236 = vpack.c.b16 %v1185, %v1184
  %v1237 = vpack.c.b16 %v1187, %v1186
  %v1238 = vpack.c.b16 %v1189, %v1188
  %v1239 = vpack.c.b16 %v1191, %v1190
  %v1240 = vpack.c.b16 %v1193, %v1192
  %v1241 = vpack.c.b16 %v1195, %v1194
  %v1242 = vpack.c.b16 %v1197, %v1196
  %v1243 = vpack.c.b16 %v1199, %v1198
  %v1244 = vpack.c.b16 %v1201, %v1200
  %v1245 = vpack.c.b16 %v1203, %v1202
  %v1246 = vpack.c.b16 %v1205, %v1204
  %v1247 = vpack.c.b16 %v1207, %v1206
  %v1248 = vpack.c.b16 %v1209, %v1208
  %v1249 = vpack.c.b16 %v1211, %v1210
  %v1250 = vpack.c.b16 %v1213, %v1212
  %v1251 = vpack.c.b16 %v1215, %v1214
  %v1252 = vpack.c.b16 %v1217, %v1216
  %v1253 = vpack.c.b16 %v1219, %v1218
  %v1254 = vpack.c.b16 %v1221, %v1220
  %v1255 = vpack.c.b16 %v1223, %v1222
  %1288 = vmatprep.subr.bf16.mxu0 0
  %1289 = vmatpush1.bf16.msra.mxu0 %v1231
  %1290 = vmatprep.subr.bf16.mxu0 0
  %1291 = vmatpush1.bf16.msra.mxu0 %v1230
  %1292 = vmatprep.subr.bf16.mxu0 0
  %1293 = vmatpush1.bf16.msra.mxu0 %v1229
  %1294 = vmatprep.subr.bf16.mxu0 0
  %1295 = vmatpush1.bf16.msra.mxu0 %v1228
  %1296 = vmatprep.subr.bf16.mxu0 0
  %1297 = vmatpush1.bf16.msra.mxu0 %v1227
  %1298 = vmatprep.subr.bf16.mxu0 0
  %1299 = vmatpush1.bf16.msra.mxu0 %v1226
  %1300 = vmatprep.subr.bf16.mxu0 0
  %1301 = vmatpush1.bf16.msra.mxu0 %v1225
  %1302 = vmatprep.subr.bf16.mxu0 0
  %1303 = vmatpush1.bf16.msra.mxu0 %v1224
  %1304 = vmatprep.subr.bf16.mxu0 0
  %1305 = vmatpush2.bf16.msra.mxu0 %v1239
  %1306 = vmatprep.subr.bf16.mxu0 0
  %1307 = vmatpush2.bf16.msra.mxu0 %v1238
  %1308 = vmatprep.subr.bf16.mxu0 0
  %1309 = vmatpush2.bf16.msra.mxu0 %v1237
  %1310 = vmatprep.subr.bf16.mxu0 0
  %1311 = vmatpush2.bf16.msra.mxu0 %v1236
  %1312 = vmatprep.subr.bf16.mxu0 0
  %1313 = vmatpush2.bf16.msra.mxu0 %v1235
  %1314 = vmatprep.subr.bf16.mxu0 0
  %1315 = vmatpush2.bf16.msra.mxu0 %v1234
  %1316 = vmatprep.subr.bf16.mxu0 0
  %1317 = vmatpush2.bf16.msra.mxu0 %v1233
  %1318 = vmatprep.subr.bf16.mxu0 0
  %1319 = vmatpush2.bf16.msra.mxu0 %v1232
  %1320 = vmatprep.mubr.bf16.mxu0 %v1022
  %1321 = vmatmul.mubr.bf16.gmra.mxu0 %v1021
  %v1322 = vpop.f32.mrf.mxu0
  %v1323 = vadd.f32 %v1094, %v1322
  %v1324 = vpop.f32.mrf.mxu0
  %v1325 = vpop.f32.mrf.mxu0
  %v1326 = vpop.f32.mrf.mxu0
  %1327 = vdwg.mxu0
  %1328 = vmatprep.subr.bf16.mxu0 0
  %1329 = vmatpush1.bf16.msra.mxu0 %v1247
  %1330 = vmatprep.subr.bf16.mxu0 0
  %1331 = vmatpush1.bf16.msra.mxu0 %v1246
  %1332 = vmatprep.subr.bf16.mxu0 0
  %1333 = vmatpush1.bf16.msra.mxu0 %v1245
  %1334 = vmatprep.subr.bf16.mxu0 0
  %1335 = vmatpush1.bf16.msra.mxu0 %v1244
  %1336 = vmatprep.subr.bf16.mxu0 0
  %1337 = vmatpush1.bf16.msra.mxu0 %v1243
  %1338 = vmatprep.subr.bf16.mxu0 0
  %1339 = vmatpush1.bf16.msra.mxu0 %v1242
  %1340 = vmatprep.subr.bf16.mxu0 0
  %1341 = vmatpush1.bf16.msra.mxu0 %v1241
  %1342 = vmatprep.subr.bf16.mxu0 0
  %1343 = vmatpush1.bf16.msra.mxu0 %v1240
  %1344 = vmatprep.subr.bf16.mxu0 0
  %1345 = vmatpush2.bf16.msra.mxu0 %v1255
  %1346 = vmatprep.subr.bf16.mxu0 0
  %1347 = vmatpush2.bf16.msra.mxu0 %v1254
  %1348 = vmatprep.subr.bf16.mxu0 0
  %1349 = vmatpush2.bf16.msra.mxu0 %v1253
  %1350 = vmatprep.subr.bf16.mxu0 0
  %1351 = vmatpush2.bf16.msra.mxu0 %v1252
  %1352 = vmatprep.subr.bf16.mxu0 0
  %1353 = vmatpush2.bf16.msra.mxu0 %v1251
  %1354 = vmatprep.subr.bf16.mxu0 0
  %1355 = vmatpush2.bf16.msra.mxu0 %v1250
  %1356 = vmatprep.subr.bf16.mxu0 0
  %1357 = vmatpush2.bf16.msra.mxu0 %v1249
  %1358 = vmatprep.subr.bf16.mxu0 0
  %1359 = vmatpush2.bf16.msra.mxu0 %v1248
  %1360 = vmatprep.mubr.bf16.mxu0 %v1024
  %1361 = vmatmul.mubr.bf16.gmra.mxu0 %v1023
  %v1362 = vpop.f32.mrf.mxu0
  %v1363 = vadd.f32 %v1323, %v1362
  %v1364 = vpop.f32.mrf.mxu0
  %v1365 = vpop.f32.mrf.mxu0
  %v1366 = vpop.f32.mrf.mxu0
  %1367 = vdwg.mxu0
  %vm1368 = vcmp.gt.f32.partialorder %v1363, 0.0
  %v1369 = vmin.f32 %v1363, 0.0
  %v1370 = vmul.f32 %v1369, 1.442695
  %v1371 = vpow.pop %v1370
  %v1372 = vsub.f32 %v1371, 1.0
  %v1373 = vsel %vm1368, %v1363, %v1372
  %v1374 = vpack.c.bf16 %v1373, %v1373
  %v1375 = vld [vmem:[%s5] sm:$0xf]
  %v1376 = vld [vmem:[%s5 + $0x4] sm:$0xf]
  %v1377 = vld [vmem:[%s5 + $0x8] sm:$0xf]
  %v1378 = vld [vmem:[%s5 + $0xc] sm:$0xf]
  %v1379 = vld [vmem:[%s5 + $0x10] sm:$0xf]
  %v1380 = vld [vmem:[%s5 + $0x14] sm:$0xf]
  %v1381 = vld [vmem:[%s5 + $0x18] sm:$0xf]
  %v1382 = vld [vmem:[%s5 + $0x1c] sm:$0xf]
  %v1383 = vld [vmem:[%s5 + $0x20] sm:$0xf]
  %v1384 = vld [vmem:[%s5 + $0x24] sm:$0xf]
  %v1385 = vld [vmem:[%s5 + $0x28] sm:$0xf]
  %v1386 = vld [vmem:[%s5 + $0x2c] sm:$0xf]
  %v1387 = vld [vmem:[%s5 + $0x30] sm:$0xf]
  %v1388 = vld [vmem:[%s5 + $0x34] sm:$0xf]
  %v1389 = vld [vmem:[%s5 + $0x38] sm:$0xf]
  %v1390 = vld [vmem:[%s5 + $0x3c] sm:$0xf]
  %v1391 = vld [vmem:[%s6] sm:$0x1]
  %v1393 = vlaneseq
  %v1394 = vshrl.u32 %v1393, 7
  %v1395 = vsub.s32 0, %v1394
  %v1396 = vrot.slane %v1391, %v1395
  %v1414 = vunpack.c.l.b16 %v1375
  %v1415 = vunpack.c.l.b16 %v1376
  %v1416 = vunpack.c.l.b16 %v1377
  %v1417 = vunpack.c.l.b16 %v1378
  %v1418 = vunpack.c.l.b16 %v1379
  %v1419 = vunpack.c.l.b16 %v1380
  %v1420 = vunpack.c.l.b16 %v1381
  %v1421 = vunpack.c.l.b16 %v1382
  %v1422 = vunpack.c.l.b16 %v1383
  %v1423 = vunpack.c.l.b16 %v1384
  %v1424 = vunpack.c.l.b16 %v1385
  %v1425 = vunpack.c.l.b16 %v1386
  %v1426 = vunpack.c.l.b16 %v1387
  %v1427 = vunpack.c.l.b16 %v1388
  %v1428 = vunpack.c.l.b16 %v1389
  %v1429 = vunpack.c.l.b16 %v1390
  %v1430 = vpack.c.b16 %v1415, %v1414
  %v1431 = vpack.c.b16 %v1417, %v1416
  %v1432 = vpack.c.b16 %v1419, %v1418
  %v1433 = vpack.c.b16 %v1421, %v1420
  %v1434 = vpack.c.b16 %v1423, %v1422
  %v1435 = vpack.c.b16 %v1425, %v1424
  %v1436 = vpack.c.b16 %v1427, %v1426
  %v1437 = vpack.c.b16 %v1429, %v1428
  %1446 = vmatprep.subr.bf16.mxu0 0
  %1447 = vmatpush1.bf16.msra.mxu0 %v1437
  %1448 = vmatprep.subr.bf16.mxu0 0
  %1449 = vmatpush1.bf16.msra.mxu0 %v1436
  %1450 = vmatprep.subr.bf16.mxu0 0
  %1451 = vmatpush1.bf16.msra.mxu0 %v1435
  %1452 = vmatprep.subr.bf16.mxu0 0
  %1453 = vmatpush1.bf16.msra.mxu0 %v1434
  %1454 = vmatprep.subr.bf16.mxu0 0
  %1455 = vmatpush1.bf16.msra.mxu0 %v1433
  %1456 = vmatprep.subr.bf16.mxu0 0
  %1457 = vmatpush1.bf16.msra.mxu0 %v1432
  %1458 = vmatprep.subr.bf16.mxu0 0
  %1459 = vmatpush1.bf16.msra.mxu0 %v1431
  %1460 = vmatprep.subr.bf16.mxu0 0
  %1461 = vmatpush1.bf16.msra.mxu0 %v1430
  %1462 = vmatprep.subr.bf16.mxu0 0
  %1463 = vmatpush2.bf16.msra.mxu0 0
  %1464 = vmatprep.subr.bf16.mxu0 0
  %1465 = vmatpush2.bf16.msra.mxu0 0
  %1466 = vmatprep.subr.bf16.mxu0 0
  %1467 = vmatpush2.bf16.msra.mxu0 0
  %1468 = vmatprep.subr.bf16.mxu0 0
  %1469 = vmatpush2.bf16.msra.mxu0 0
  %1470 = vmatprep.subr.bf16.mxu0 0
  %1471 = vmatpush2.bf16.msra.mxu0 0
  %1472 = vmatprep.subr.bf16.mxu0 0
  %1473 = vmatpush2.bf16.msra.mxu0 0
  %1474 = vmatprep.subr.bf16.mxu0 0
  %1475 = vmatpush2.bf16.msra.mxu0 0
  %1476 = vmatprep.subr.bf16.mxu0 0
  %1477 = vmatpush2.bf16.msra.mxu0 0
  %1478 = vmatprep.mubr.bf16.mxu0 0
  %1479 = vmatmul.mubr.bf16.gmra.mxu0 %v1374
  %v1480 = vpop.f32.mrf.mxu0
  %v1481 = vadd.f32 %v1396, %v1480
  %v1482 = vpop.f32.mrf.mxu0
  %v1483 = vpop.f32.mrf.mxu0
  %v1484 = vpop.f32.mrf.mxu0
  %1485 = vdwg.mxu0
  %v1486 = vpack.c.bf16 %v1481, %v1481
  %1487 = vst [vmem:[%s7] sm:$0xf] %v1486
  // Predicated region
  $region30: #{eegnet_forward.1} parent=0 // pred_check
    _
  $region31: #{eegnet_forward.1} parent=0 // pred_check_branch
    %1489 = sbr.rel (0) target = $region33
  $region32: #{eegnet_forward.1} parent=0 // pred_region
    _
  $region33: #{eegnet_forward.1} parent=0 // pred_fallthru
    _
  // Predicated region
  $region34: #{eegnet_forward.1} parent=0 // pred_check
    _
  $region35: #{eegnet_forward.1} parent=0 // pred_check_branch
    %1491 = sbr.rel (0) target = $region37
  $region36: #{eegnet_forward.1} parent=0 // pred_region
    _
  $region37: #{eegnet_forward.1} parent=0 // pred_fallthru
    _

</llo_original>
